<compile_context>
chip_gen: v5e
topology: v5e:2x2
jax: 0.10.0
libtpu: 0.0.40
codegen_flags: <defaults>
</compile_context>

<pallas_src>
import math

import jax
import jax.numpy as jnp
from jax import lax
from jax.experimental import pallas as pl
from jax.experimental.pallas import tpu as pltpu


def lora_kernel(x_ref, a_ref, bt_ref, o_ref):
    # x_ref:  (tm, in_features)
    # a_ref:  (rank, in_features)      == A_w (lane-dense, NOT transposed)
    # bt_ref: (rank, out_features)     == B_w.T (lane-dense)
    # o_ref:  (tm, out_features)
    # h = x @ A_w.T  via dot_general contracting both last dims; f32 accumulate.
    h = lax.dot_general(
        x_ref[...],
        a_ref[...],
        dimension_numbers=(((1,), (1,)), ((), ())),
        preferred_element_type=jnp.float32,
    )  # (tm, rank) f32
    # Feed the MXU in the input dtype (bf16 inputs -> bf16 second matmul), f32 acc.
    h = h.astype(x_ref.dtype)
    y = jnp.dot(h, bt_ref[...], preferred_element_type=jnp.float32)
    o_ref[...] = y.astype(o_ref.dtype)


def lora_forward(x, a_weight, b_weight, *, tm=None, vmem_budget_bytes=20 << 20):
    """LoRA forward.

    x:        (..., in_features)
    a_weight: (rank, in_features)   -- A.weight
    b_weight: (out_features, rank)  -- B.weight
    returns:  (..., out_features)
    """
    in_features = x.shape[-1]
    rank, in_f2 = a_weight.shape
    out_features, rank2 = b_weight.shape
    assert in_f2 == in_features and rank2 == rank

    lead = x.shape[:-1]
    m = math.prod(lead) if lead else 1
    x2 = x.reshape(m, in_features)
    b_t = b_weight.T  # (rank, out_features); tiny one-off transpose, lane-dense.

    itemsize = jnp.dtype(x.dtype).itemsize

    # Pick the M tile from a conservative VMEM budget (double-buffered x + out
    # tiles). Budget + 48 MiB limit fit every generation incl. v7x (64 MiB VMEM).
    if tm is None:
        per_row = 2 * itemsize * (in_features + out_features)
        tm = min(1024, vmem_budget_bytes // per_row)
        tm = max(8, (tm // 8) * 8)
    if tm >= m:
        tm = m  # single tile; "equals full array dim" exception covers any M
    grid_m = pl.cdiv(m, tm)

    # Advisory cost estimate so XLA can overlap this call with surrounding work
    # (e.g. the base projection the LoRA delta is added to).
    w_itemsize = jnp.dtype(a_weight.dtype).itemsize
    cost = pl.CostEstimate(
        flops=2 * m * rank * (in_features + out_features),
        transcendentals=0,
        bytes_accessed=(m * (in_features + out_features)) * itemsize
        + (a_weight.size + b_t.size) * w_itemsize,
    )

    out2 = pl.pallas_call(
        lora_kernel,
        out_shape=jax.ShapeDtypeStruct((m, out_features), x.dtype),
        grid_spec=pltpu.PrefetchScalarGridSpec(
            num_scalar_prefetch=0,
            grid=(grid_m,),
            in_specs=[
                pl.BlockSpec((tm, in_features), lambda i: (i, 0)),
                pl.BlockSpec((rank, in_features), lambda i: (0, 0)),   # resident
                pl.BlockSpec((rank, out_features), lambda i: (0, 0)),  # resident
            ],
            out_specs=pl.BlockSpec((tm, out_features), lambda i: (i, 0)),
        ),
        compiler_params=pltpu.CompilerParams(
            dimension_semantics=("parallel",),  # lets v7x shard tiles over 2 TCs
            vmem_limit_bytes=48 << 20,
        ),
        cost_estimate=cost,
    )(x2, a_weight, b_t)
    return out2.reshape(*lead, out_features)


if __name__ == "__main__":
    # Small shapes consistent with the module's forward: x (batch, seq, in_features)
    batch, seq, in_features, out_features, rank = 2, 8, 32, 32, 4

    key = jax.random.PRNGKey(0)
    kx, ka = jax.random.split(key)

    x = jax.random.normal(kx, (batch, seq, in_features), dtype=jnp.float32)

    # Deterministic parameter init matching the module's __init__:
    #   A.weight ~ N(0, 0.02), B.weight = 0
    a_weight = 0.02 * jax.random.normal(ka, (rank, in_features), dtype=jnp.float32)
    b_weight = jnp.zeros((out_features, rank), dtype=jnp.float32)

    out = jax.block_until_ready(lora_forward(x, a_weight, b_weight))

    # Reference (same math as the PyTorch forward).
    ref = (x.reshape(-1, in_features) @ a_weight.T @ b_weight.T).reshape(
        batch, seq, out_features
    )
    assert out.shape == (batch, seq, out_features)
    assert jnp.allclose(out, ref, atol=1e-5), "mismatch vs reference"

    # Nonzero B to exercise both matmuls.
    kb = jax.random.PRNGKey(1)
    b_weight_nz = 0.02 * jax.random.normal(kb, (out_features, rank), dtype=jnp.float32)
    out_nz = jax.block_until_ready(lora_forward(x, a_weight, b_weight_nz))
    ref_nz = (x.reshape(-1, in_features) @ a_weight.T @ b_weight_nz.T).reshape(
        batch, seq, out_features
    )
    assert jnp.allclose(out_nz, ref_nz, atol=1e-5), "mismatch vs reference (nonzero B)"

    # bf16 fast path (halves HBM bytes; kernel is dtype-preserving, f32 accumulate).
    out_bf16 = jax.block_until_ready(
        lora_forward(
            x.astype(jnp.bfloat16),
            a_weight.astype(jnp.bfloat16),
            b_weight_nz.astype(jnp.bfloat16),
        )
    )
    assert out_bf16.dtype == jnp.bfloat16
    assert jnp.allclose(
        out_bf16.astype(jnp.float32), ref_nz, atol=5e-3, rtol=5e-2
    ), "mismatch vs reference (bf16 path)"

    print("KERNEL_OK")
</pallas_src>

<mosaic_0001>
module attributes {stable_mosaic.version = 11 : i64} {
  func.func @lora_kernel(%arg0: i32, %arg1: memref<16x32xf32, #tpu.memory_space<vmem>>, %arg2: memref<4x32xf32, #tpu.memory_space<vmem>>, %arg3: memref<4x32xf32, #tpu.memory_space<vmem>>, %arg4: memref<16x32xf32, #tpu.memory_space<vmem>>) attributes {dimension_semantics = [#tpu.dimension_semantics<parallel>], iteration_bounds = array<i64: 1>, scalar_prefetch = 0 : i64, scratch_operands = 0 : i64, tpu.core_type = #tpu.core_type<tc>, window_params = [{transform_indices = @transform_0, window_bounds = array<i64: 16, 32>}, {pipeline_mode = #tpu.pipeline_mode<synchronous>, transform_indices = @transform_1, window_bounds = array<i64: 4, 32>}, {pipeline_mode = #tpu.pipeline_mode<synchronous>, transform_indices = @transform_2, window_bounds = array<i64: 4, 32>}, {transform_indices = @transform_3, window_bounds = array<i64: 16, 32>}]} {
    %c0 = arith.constant 0 : index
    %c0_0 = arith.constant 0 : index
    %0 = vector.load %arg1[%c0, %c0_0] : memref<16x32xf32, #tpu.memory_space<vmem>>, vector<16x32xf32>
    %c0_1 = arith.constant 0 : index
    %c0_2 = arith.constant 0 : index
    %1 = vector.load %arg2[%c0_1, %c0_2] : memref<4x32xf32, #tpu.memory_space<vmem>>, vector<4x32xf32>
    %cst = arith.constant dense<0.000000e+00> : vector<16x4xf32>
    %2 = tpu.matmul %0, %1, %cst {dimension_numbers = #tpu.dot_dimension_numbers<[1], [1], [0], [0], [0, 0, 1, 0], [], []>} : vector<16x32xf32>, vector<4x32xf32>, vector<16x4xf32> -> vector<16x4xf32>
    %c0_3 = arith.constant 0 : index
    %c0_4 = arith.constant 0 : index
    %3 = vector.load %arg3[%c0_3, %c0_4] : memref<4x32xf32, #tpu.memory_space<vmem>>, vector<4x32xf32>
    %cst_5 = arith.constant dense<0.000000e+00> : vector<16x32xf32>
    %4 = tpu.matmul %2, %3, %cst_5 {dimension_numbers = #tpu.dot_dimension_numbers<[1], [0], [0], [1], [0, 0, 1, 1], [], []>} : vector<16x4xf32>, vector<4x32xf32>, vector<16x32xf32> -> vector<16x32xf32>
    %c0_6 = arith.constant 0 : index
    %c0_7 = arith.constant 0 : index
    %5 = vector.load %arg4[%c0_6, %c0_7] : memref<16x32xf32, #tpu.memory_space<vmem>>, vector<16x32xf32>
    tpu.vector_store %arg4[%c0_6, %c0_7], %4 {strides = array<i32>} : memref<16x32xf32, #tpu.memory_space<vmem>>, vector<16x32xf32>,
    return
  }
  func.func @transform_0(%arg0: i32) -> (i32, i32) {
    %c0_i32 = arith.constant 0 : i32
    %c0_i32_0 = arith.constant 0 : i32
    return %arg0, %c0_i32 : i32, i32
  }
  func.func @transform_1(%arg0: i32) -> (i32, i32) {
    %c0_i32 = arith.constant 0 : i32
    %c0_i32_0 = arith.constant 0 : i32
    %c0_i32_1 = arith.constant 0 : i32
    return %c0_i32, %c0_i32_0 : i32, i32
  }
  func.func @transform_2(%arg0: i32) -> (i32, i32) {
    %c0_i32 = arith.constant 0 : i32
    %c0_i32_0 = arith.constant 0 : i32
    %c0_i32_1 = arith.constant 0 : i32
    return %c0_i32, %c0_i32_0 : i32, i32
  }
  func.func @transform_3(%arg0: i32) -> (i32, i32) {
    %c0_i32 = arith.constant 0 : i32
    %c0_i32_0 = arith.constant 0 : i32
    return %arg0, %c0_i32 : i32, i32
  }
}

</mosaic_0001>

<llo_original>
// kernel: tpu_custom_call.1
$region0: #{tpu_custom_call.1}
  #allocation0 [shape = 'u32[]', space=smem, size = 0x4, offset = 0x4, fixed_abs, tag = 'smem constant byte address 0x4 - core index']
  #allocation1 [shape = 'u32[72,128]{1,0:T(1,128)}', space=vmem, size = 0x9000, scoped, tag = 'internal scratch']
  %s0 = inlined_call_operand.hbm [shape: f32[16,32], index: 0, kind: input, shape index: {}]
  %s1 = inlined_call_operand.hbm [shape: f32[4,32], index: 1, kind: input, shape index: {}]
  %s2 = inlined_call_operand.hbm [shape: f32[4,32], index: 2, kind: input, shape index: {}]
  %s3 = inlined_call_operand.hbm [shape: f32[16,32], index: 3, kind: output, shape index: {}]
  %s4 = sld [smem:[#allocation0]]
  $region34: #{tpu_custom_call.1} parent=0
    _
  %s6 = ssub.s32 1, %s4
  %s7 = scalar_select 0, %s6, %s4
  $region1: #{tpu_custom_call.1} parent=0
    #allocation2 [shape = 'u8[8192]{0}', space=vmem, size = 0x2000, scoped, tag = 'input window, operand 0, single buffered']
    #allocation3 [shape = 's32[1]{0}', space=sflag, size = 0x4, scoped, tag = 'scoped memory for tpu_custom_call.1']
    #allocation4 [shape = 's32[1]{0}', space=sflag, size = 0x4, scoped, tag = 'scoped memory for tpu_custom_call.1']
    #allocation5 [shape = 'u8[2048]{0}', space=vmem, size = 0x800, scoped, tag = 'input window, operand 1, single buffered']
    #allocation6 [shape = 's32[1]{0}', space=sflag, size = 0x4, scoped, tag = 'scoped memory for tpu_custom_call.1']
    #allocation7 [shape = 'u8[2048]{0}', space=vmem, size = 0x800, scoped, tag = 'input window, operand 2, single buffered']
    #allocation8 [shape = 'u8[8192]{0}', space=vmem, size = 0x2000, scoped, tag = 'output window, operand 0, single buffered']
    %8 = vsyncpa [#allocation3], 0
    %9 = vsyncpa [#allocation6], 0
    %10 = vsyncpa [#allocation4], 0
    // Predicated region
    $region2: #{tpu_custom_call.1} parent=1 // pred_check
      _
    $region3: #{tpu_custom_call.1} parent=1 // pred_check_branch
      %12 = sbr.rel (0) target = $region5
    $region4: #{tpu_custom_call.1} parent=1 // pred_region
      %14 = vsyncadd [#allocation3], 0
      %s15 = sshll.u32 %s0, 4
      %s16 = int_to_ptr.hbm [resolvable:$true] %s15
      %s17 = sshll.u32 [#allocation2], 4
      %s18 = int_to_ptr.vmem [resolvable:$true] %s17
      %23 = dma.hbm_to_vmem [thread:$0]  %s16, 256, %s18, [#allocation3], 128, 128, 8
    $region5: #{tpu_custom_call.1} parent=1 // pred_fallthru
      _
    // Predicated region
    $region6: #{tpu_custom_call.1} parent=1 // pred_check
      _
    $region7: #{tpu_custom_call.1} parent=1 // pred_check_branch
      %25 = sbr.rel (0) target = $region9
    $region8: #{tpu_custom_call.1} parent=1 // pred_region
      %27 = vsyncadd [#allocation6], 0
      %s29 = sshll.u32 %s1, 4
      %s30 = int_to_ptr.hbm [resolvable:$true] %s29
      %s31 = sshll.u32 [#allocation5], 4
      %s32 = int_to_ptr.vmem [resolvable:$true] %s31
      %34 = dma.hbm_to_vmem [thread:$0]  %s30, 64, %s32, [#allocation6]
    $region9: #{tpu_custom_call.1} parent=1 // pred_fallthru
      _
    // Predicated region
    $region10: #{tpu_custom_call.1} parent=1 // pred_check
      _
    $region11: #{tpu_custom_call.1} parent=1 // pred_check_branch
      %36 = sbr.rel (0) target = $region13
    $region12: #{tpu_custom_call.1} parent=1 // pred_region
      %38 = vsyncadd [#allocation6], 0
      %s40 = sshll.u32 %s2, 4
      %s41 = int_to_ptr.hbm [resolvable:$true] %s40
      %s42 = sshll.u32 [#allocation7], 4
      %s43 = int_to_ptr.vmem [resolvable:$true] %s42
      %45 = dma.hbm_to_vmem [thread:$0]  %s41, 64, %s43, [#allocation6]
    $region13: #{tpu_custom_call.1} parent=1 // pred_fallthru
      _
    // Predicated region
    $region14: #{tpu_custom_call.1} parent=1 // pred_check
      _
    $region15: #{tpu_custom_call.1} parent=1 // pred_check_branch
      %47 = sbr.rel (0) target = $region17
    $region16: #{tpu_custom_call.1} parent=1 // pred_region
      %49 = dma.done [#allocation3], 256
    $region17: #{tpu_custom_call.1} parent=1 // pred_fallthru
      _
    // Predicated region
    $region18: #{tpu_custom_call.1} parent=1 // pred_check
      _
    $region19: #{tpu_custom_call.1} parent=1 // pred_check_branch
      %51 = sbr.rel (0) target = $region21
    $region20: #{tpu_custom_call.1} parent=1 // pred_region
      %53 = dma.done [#allocation6], 64
    $region21: #{tpu_custom_call.1} parent=1 // pred_fallthru
      _
    // Predicated region
    $region22: #{tpu_custom_call.1} parent=1 // pred_check
      _
    $region23: #{tpu_custom_call.1} parent=1 // pred_check_branch
      %55 = sbr.rel (0) target = $region25
    $region24: #{tpu_custom_call.1} parent=1 // pred_region
      %57 = dma.done [#allocation6], 64
    $region25: #{tpu_custom_call.1} parent=1 // pred_fallthru
      _
    %v58 = vld [vmem:[#allocation2] sm:$0xff]
    %v59 = vld [vmem:[#allocation2 + $0x8] sm:$0xff]
    %v60 = vld [vmem:[#allocation5] sm:$0xf]
    %vm61 = vcmask 261120
    %v63 = vsel %vm61, %v58, 0
    %v66 = vsel %vm61, %v59, 0
    %v69 = vsel %vm61, %v60, 0
    %71 = vmatpush.xpose.msra.mxu0 0.0
    %72 = vmatpush.xpose.msra.mxu0 0.0
    %73 = vmatpush.xpose.msra.mxu0 0.0
    %74 = vmatpush.xpose.msra.mxu0 0.0
    %75 = vmatpush.xpose.msra.mxu0 0.0
    %76 = vmatpush.xpose.msra.mxu0 0.0
    %77 = vmatpush.xpose.msra.mxu0 0.0
    %78 = vmatpush.xpose.msra.mxu0 0.0
    %79 = vmatpush.xpose.msra.mxu0 0.0
    %80 = vmatpush.xpose.msra.mxu0 0.0
    %81 = vmatpush.xpose.msra.mxu0 0.0
    %82 = vmatpush.xpose.msra.mxu0 0.0
    %83 = vmatpush.xpose.msra.mxu0 0.0
    %84 = vmatpush.xpose.msra.mxu0 0.0
    %85 = vmatpush.xpose.msra.mxu0 0.0
    %86 = vmatpush.xpose.msra.mxu0 %v69
    %87 = vmatmul.f32.gmra.mxu0 %v63
    %v88 = vpop.f32.mrf.mxu0
    %v89 = vadd.f32 0.0, %v88
    %90 = vmatmul.f32.gmra.mxu0 %v66
    %v91 = vpop.f32.mrf.mxu0
    %v92 = vadd.f32 0.0, %v91
    %93 = vdwg.mxu0
    %v94 = vld [vmem:[#allocation7] sm:$0xf]
    %vm95 = vcmask 31744
    %v97 = vsel %vm95, %v89, 0
    %v100 = vsel %vm95, %v92, 0
    %vm102 = vcmask 1043456
    %v104 = vsel %vm102, %v94, 0
    %106 = vmatpush.msra.mxu0 0.0
    %107 = vmatpush.msra.mxu0 0.0
    %108 = vmatpush.msra.mxu0 0.0
    %109 = vmatpush.msra.mxu0 0.0
    %110 = vmatpush.msra.mxu0 0.0
    %111 = vmatpush.msra.mxu0 0.0
    %112 = vmatpush.msra.mxu0 0.0
    %113 = vmatpush.msra.mxu0 0.0
    %114 = vmatpush.msra.mxu0 0.0
    %115 = vmatpush.msra.mxu0 0.0
    %116 = vmatpush.msra.mxu0 0.0
    %117 = vmatpush.msra.mxu0 0.0
    %118 = vmatpush.msra.mxu0 0.0
    %119 = vmatpush.msra.mxu0 0.0
    %120 = vmatpush.msra.mxu0 0.0
    %121 = vmatpush.msra.mxu0 %v104
    %122 = vmatmul.f32.gmra.mxu0 %v97
    %v123 = vpop.f32.mrf.mxu0
    %v124 = vadd.f32 0.0, %v123
    %125 = vmatmul.f32.gmra.mxu0 %v100
    %v126 = vpop.f32.mrf.mxu0
    %v127 = vadd.f32 0.0, %v126
    %128 = vdwg.mxu0
    %129 = vst.msk [vmem:[#allocation8] sm:$0xff] %vm61, %v124
    %130 = vst.msk [vmem:[#allocation8 + $0x8] sm:$0xff] %vm61, %v127
    // Predicated region
    $region26: #{tpu_custom_call.1} parent=1 // pred_check
      _
    $region27: #{tpu_custom_call.1} parent=1 // pred_check_branch
      %132 = sbr.rel (0) target = $region29
    $region28: #{tpu_custom_call.1} parent=1 // pred_region
      %134 = vsyncadd [#allocation4], 0
      %s135 = sshll.u32 [#allocation8], 4
      %s136 = int_to_ptr.vmem [resolvable:$true] %s135
      %s137 = sshll.u32 %s3, 4
      %s138 = int_to_ptr.hbm [resolvable:$true] %s137
      %143 = dma.vmem_to_hbm [thread:$0]  %s136, 256, %s138, [#allocation4], 128, 128, 8
    $region29: #{tpu_custom_call.1} parent=1 // pred_fallthru
      _
    // Predicated region
    $region30: #{tpu_custom_call.1} parent=1 // pred_check
      _
    $region31: #{tpu_custom_call.1} parent=1 // pred_check_branch
      %145 = sbr.rel (0) target = $region33
    $region32: #{tpu_custom_call.1} parent=1 // pred_region
      %147 = dma.done [#allocation4], 256
    $region33: #{tpu_custom_call.1} parent=1 // pred_fallthru
      _
    %148 = vsyncpa [#allocation3], 1
    %149 = vsyncpa [#allocation6], 1
    %150 = vsyncpa [#allocation4], 1

</llo_original>
